<compile_context>
chip_gen: v5e
topology: v5e:2x2
jax: 0.10.0
libtpu: 0.0.40
codegen_flags: <defaults>
</compile_context>

<pallas_src>
import numpy as np
import jax
import jax.numpy as jnp
from jax.experimental import pallas as pl
from jax.experimental.pallas import tpu as pltpu

EPS = 1e-5
C1, C2, K = 4, 8, 3


# ----------------------------------------------------------------------------
# Kernel: 3 MXU matmuls + 2 (sublane-shift, max, PReLU) epilogues.
# All activations are (rows, batch_lanes); weights act from the left.
# ----------------------------------------------------------------------------
def cnn1d_pool_kernel(x_ref,
                      w1_ref, b1_ref, a1_ref,
                      w2_ref, b2_ref, a2_ref,
                      wl_ref, bl_ref,
                      out_ref):
    # conv1 + folded BN1: one Toeplitz matmul.  (48, F) @ (F, TB) -> (48, TB)
    h1 = (jnp.dot(w1_ref[...], x_ref[...], preferred_element_type=jnp.float32)
          + b1_ref[...])
    # PReLU (single shared parameter, PyTorch default).
    h1 = jnp.where(h1 >= 0, h1, a1_ref[0] * h1)
    # MaxPool1d(2,2): pairwise max of adjacent sublane rows; the even-row
    # selection is folded into W2 on the host (unaddressed rows have zero
    # weight), so no selector matmul is issued in-kernel.
    z1 = jnp.maximum(h1[:-1, :], h1[1:, :])                      # (47, TB)

    # conv2 + folded BN2 (pool1 selector folded in).  (32, 47) @ (47, TB)
    h2 = (jnp.dot(w2_ref[...], z1, preferred_element_type=jnp.float32)
          + b2_ref[...])
    h2 = jnp.where(h2 >= 0, h2, a2_ref[0] * h2)
    z2 = jnp.maximum(h2[:-1, :], h2[1:, :])                      # (31, TB)

    # flatten + Linear (pool2 selector folded into WL).  (T, 31) @ (31, TB)
    out = jnp.dot(wl_ref[...], z2, preferred_element_type=jnp.float32) + bl_ref[...]
    out_ref[...] = out.astype(out_ref.dtype)                     # lane-dense store
    # TODO(synk): Dropout is identity (eval mode); training-mode RNG dropout not implemented.


# ----------------------------------------------------------------------------
# Host-side parameter glue: fold BN into conv weights, build transposed
# Toeplitz matrices, and fold the maxpool even-index selectors into the
# downstream weights.  All weights are produced in the (out_rows, in_rows)
# orientation used by the transposed (batch-on-lanes) kernel.
# ----------------------------------------------------------------------------
def _fold_weights(p, F):
    L1 = F - K + 1            # after conv1
    L2 = L1 // 2              # after pool1
    L3 = L2 - K + 1           # after conv2
    L4 = L3 // 2              # after pool2
    T = int(np.asarray(p['bl']).shape[0])

    w1 = np.asarray(p['w1'], np.float32)            # (C1, 1, K)
    b1 = np.asarray(p['b1'], np.float32)
    s1 = np.asarray(p['gamma1'], np.float32) / np.sqrt(np.asarray(p['var1'], np.float32) + EPS)
    t1 = np.asarray(p['beta1'], np.float32) - np.asarray(p['mean1'], np.float32) * s1
    w2 = np.asarray(p['w2'], np.float32)            # (C2, C1, K)
    b2 = np.asarray(p['b2'], np.float32)
    s2 = np.asarray(p['gamma2'], np.float32) / np.sqrt(np.asarray(p['var2'], np.float32) + EPS)
    t2 = np.asarray(p['beta2'], np.float32) - np.asarray(p['mean2'], np.float32) * s2
    wl = np.asarray(p['wl'], np.float32)            # (T, C2*L4)
    bl = np.asarray(p['bl'], np.float32)

    # conv1 Toeplitz (BN scale folded), row layout channel-major: r = c*L1 + l.
    W1T = np.zeros((C1 * L1, F), np.float32)
    b1T = np.zeros((C1 * L1, 1), np.float32)
    for c in range(C1):
        for l in range(L1):
            b1T[c * L1 + l, 0] = b1[c] * s1[c] + t1[c]
            for k in range(K):
                W1T[c * L1 + l, l + k] += w1[c, 0, k] * s1[c]

    # conv2 Toeplitz, BN folded, pool1's even-row selector folded in:
    # input row c*L1 + 2*(l3+k) addresses z1 = max(h1[:-1], h1[1:]).
    N1 = C1 * L1 - 1
    W2T = np.zeros((C2 * L3, N1), np.float32)
    b2T = np.zeros((C2 * L3, 1), np.float32)
    for o in range(C2):
        for l3 in range(L3):
            b2T[o * L3 + l3, 0] = b2[o] * s2[o] + t2[o]
            for c in range(C1):
                for k in range(K):
                    W2T[o * L3 + l3, c * L1 + 2 * (l3 + k)] += w2[o, c, k] * s2[o]

    # final Linear weight with pool2's even-row selector folded in.
    N2 = C2 * L3 - 1
    WLT = np.zeros((T, N2), np.float32)
    for o in range(C2):
        for l4 in range(L4):
            WLT[:, o * L3 + 2 * l4] = wl[:, o * L4 + l4]

    return (jnp.asarray(W1T), jnp.asarray(b1T),
            jnp.asarray(W2T), jnp.asarray(b2T),
            jnp.asarray(WLT), jnp.asarray(bl.reshape(T, 1)))


def _pick_batch_tile(B, batch_tile):
    """Lane-axis tile: multiple of 128, or the full batch.  Prefer >=2 tiles
    (v7x megacore) when B allows; fewer, fatter steps otherwise (per-step
    overhead ~0.35us dominates this tiny kernel)."""
    bt = max(128, (batch_tile // 128) * 128)
    if B > bt:
        return bt                      # multiple of 128; last tile may be partial
    if B >= 256 and B % 256 == 0:
        return B // 2                  # two lane-dense parallel tiles
    return B                           # single tile covering the full batch


def cnn1d_pool_forward(cont_x, cate_x, p, *, batch_tile=2048):
    B, n_num = cont_x.shape
    _, n_cat = cate_x.shape
    F = n_num + n_cat
    W1T, b1T, W2T, b2T, WLT, blT = _fold_weights(p, F)
    T = blT.shape[0]
    a1 = jnp.asarray(p['a1'], jnp.float32).reshape(1)
    a2 = jnp.asarray(p['a2'], jnp.float32).reshape(1)

    # One merged input, transposed so BATCH sits on the 128-lane axis.
    xT = jnp.concatenate([cont_x, cate_x], axis=1).astype(jnp.float32).T  # (F, B)

    TB = _pick_batch_tile(B, batch_tile)
    grid = (pl.cdiv(B, TB),)

    def const2d(arr):                  # tiny resident weight, constant block
        return pl.BlockSpec(arr.shape, lambda i: (0, 0))

    smem = pl.BlockSpec(memory_space=pltpu.MemorySpace.SMEM)

    # Advisory cost: 3 small matmuls per row, streaming (F + T) f32 per row.
    flops = int(2 * B * (W1T.shape[0] * W1T.shape[1]
                         + W2T.shape[0] * W2T.shape[1]
                         + WLT.shape[0] * WLT.shape[1]))
    bytes_accessed = int(4 * (B * (F + T) + W1T.size + W2T.size + WLT.size
                              + b1T.size + b2T.size + blT.size))

    outT = pl.pallas_call(
        cnn1d_pool_kernel,
        out_shape=jax.ShapeDtypeStruct((T, B), jnp.float32),
        grid=grid,
        in_specs=[
            pl.BlockSpec((F, TB), lambda i: (0, i)),   # x^T: lane-dense input DMA
            const2d(W1T), const2d(b1T), smem,          # conv1/BN1, PReLU1 (SMEM scalar)
            const2d(W2T), const2d(b2T), smem,          # conv2/BN2, PReLU2
            const2d(WLT), const2d(blT),                # linear
        ],
        out_specs=pl.BlockSpec((T, TB), lambda i: (0, i)),   # out^T: lane-dense store
        compiler_params=pltpu.CompilerParams(
            dimension_semantics=("parallel",),
            vmem_limit_bytes=32 * 1024 * 1024),        # ample headroom on v5e/v6e/v7x
        cost_estimate=pl.CostEstimate(flops=flops, transcendentals=0,
                                      bytes_accessed=bytes_accessed),
    )(xT, W1T, b1T, a1, W2T, b2T, a2, WLT, blT)

    return outT.T                                       # (B, T), trivial host transpose


# ----------------------------------------------------------------------------
# Parameter init + pure-JAX reference (PyTorch module in eval mode).
# ----------------------------------------------------------------------------
def init_params(key, n_features, n_targets):
    L1 = n_features - 2
    L2 = L1 // 2
    L3 = L2 - 2
    L4 = L3 // 2
    ks = jax.random.split(key, 16)
    f32 = jnp.float32
    return {
        'w1': 0.5 * jax.random.normal(ks[0], (C1, 1, K), f32),
        'b1': 0.1 * jax.random.normal(ks[1], (C1,), f32),
        'gamma1': 1.0 + 0.1 * jax.random.normal(ks[2], (C1,), f32),
        'beta1': 0.1 * jax.random.normal(ks[3], (C1,), f32),
        'mean1': 0.1 * jax.random.normal(ks[4], (C1,), f32),
        'var1': 1.0 + 0.1 * jnp.abs(jax.random.normal(ks[5], (C1,), f32)),
        'a1': jnp.array([0.25], f32),                    # PReLU default init
        'w2': 0.3 * jax.random.normal(ks[6], (C2, C1, K), f32),
        'b2': 0.1 * jax.random.normal(ks[7], (C2,), f32),
        'gamma2': 1.0 + 0.1 * jax.random.normal(ks[8], (C2,), f32),
        'beta2': 0.1 * jax.random.normal(ks[9], (C2,), f32),
        'mean2': 0.1 * jax.random.normal(ks[10], (C2,), f32),
        'var2': 1.0 + 0.1 * jnp.abs(jax.random.normal(ks[11], (C2,), f32)),
        'a2': jnp.array([0.25], f32),
        'wl': 0.2 * jax.random.normal(ks[12], (n_targets, C2 * L4), f32),
        'bl': 0.1 * jax.random.normal(ks[13], (n_targets,), f32),
    }


def reference_forward(cont_x, cate_x, p):
    """Pure-JAX reference matching the PyTorch module in eval mode."""
    x = jnp.concatenate([cont_x, cate_x], axis=1)[:, None, :]    # (B, 1, F)

    def conv1d(x, w, b):
        k = w.shape[-1]
        lo = x.shape[-1] - k + 1
        cols = jnp.stack([x[:, :, i:i + lo] for i in range(k)], axis=-1)  # (B,Cin,Lo,K)
        return jnp.einsum('bclk,ock->bol', cols, w) + b[None, :, None]

    def block(x, w, b, gamma, beta, mean, var, a):
        h = conv1d(x, w, b)
        h = (h - mean[None, :, None]) / jnp.sqrt(var[None, :, None] + EPS)
        h = h * gamma[None, :, None] + beta[None, :, None]
        h = jnp.where(h >= 0, h, a * h)
        Bn, C, L = h.shape
        return h.reshape(Bn, C, L // 2, 2).max(axis=-1)

    h = block(x, p['w1'], p['b1'], p['gamma1'], p['beta1'], p['mean1'], p['var1'], p['a1'][0])
    h = block(h, p['w2'], p['b2'], p['gamma2'], p['beta2'], p['mean2'], p['var2'], p['a2'][0])
    flat = h.reshape(h.shape[0], -1)
    return flat @ p['wl'].T + p['bl'][None, :]


if __name__ == "__main__":
    # cfg: 8 numeric + 6 categorical features (F=14 keeps all pooled lengths
    # even, matching the Linear in_features formula), 3 target cols, batch=2.
    B, n_num, n_cat, n_tgt = 2, 8, 6, 3

    key = jax.random.PRNGKey(0)
    kx, kc, kp = jax.random.split(key, 3)
    cont_x = jax.random.normal(kx, (B, n_num), jnp.float32)
    cate_x = jax.random.normal(kc, (B, n_cat), jnp.float32)
    params = init_params(kp, n_num + n_cat, n_tgt)

    out = jax.block_until_ready(cnn1d_pool_forward(cont_x, cate_x, params))
    ref = reference_forward(cont_x, cate_x, params)
    np.testing.assert_allclose(np.asarray(out), np.asarray(ref), rtol=5e-3, atol=5e-3)

    # Larger batch: two lane-dense parallel tiles of 512 (v7x megacore path).
    B2 = 1024
    kb1, kb2 = jax.random.split(jax.random.PRNGKey(2))
    cont_b = jax.random.normal(kb1, (B2, n_num), jnp.float32)
    cate_b = jax.random.normal(kb2, (B2, n_cat), jnp.float32)
    out_b = jax.block_until_ready(cnn1d_pool_forward(cont_b, cate_b, params))
    ref_b = reference_forward(cont_b, cate_b, params)
    np.testing.assert_allclose(np.asarray(out_b), np.asarray(ref_b), rtol=5e-3, atol=5e-3)

    # Ragged batch (B % TB != 0): exercises masked writeback on the last tile.
    B3 = 1000
    kb3, kb4 = jax.random.split(jax.random.PRNGKey(3))
    cont_r = jax.random.normal(kb3, (B3, n_num), jnp.float32)
    cate_r = jax.random.normal(kb4, (B3, n_cat), jnp.float32)
    out_r = jax.block_until_ready(
        cnn1d_pool_forward(cont_r, cate_r, params, batch_tile=512))
    ref_r = reference_forward(cont_r, cate_r, params)
    np.testing.assert_allclose(np.asarray(out_r), np.asarray(ref_r), rtol=5e-3, atol=5e-3)

    print("KERNEL_OK")
</pallas_src>

<mosaic_0001>
module attributes {stable_mosaic.version = 11 : i64} {
  func.func @cnn1d_pool_kernel(%arg0: i32, %arg1: memref<14x2xf32, #tpu.memory_space<vmem>>, %arg2: memref<48x14xf32, #tpu.memory_space<vmem>>, %arg3: memref<48x1xf32, #tpu.memory_space<vmem>>, %arg4: memref<1xf32, #tpu.memory_space<smem>>, %arg5: memref<32x47xf32, #tpu.memory_space<vmem>>, %arg6: memref<32x1xf32, #tpu.memory_space<vmem>>, %arg7: memref<1xf32, #tpu.memory_space<smem>>, %arg8: memref<3x31xf32, #tpu.memory_space<vmem>>, %arg9: memref<3x1xf32, #tpu.memory_space<vmem>>, %arg10: memref<3x2xf32, #tpu.memory_space<vmem>>) attributes {dimension_semantics = [#tpu.dimension_semantics<parallel>], iteration_bounds = array<i64: 1>, scalar_prefetch = 0 : i64, scratch_operands = 0 : i64, tpu.core_type = #tpu.core_type<tc>, window_params = [{transform_indices = @transform_0, window_bounds = array<i64: 14, 2>}, {pipeline_mode = #tpu.pipeline_mode<synchronous>, transform_indices = @transform_1, window_bounds = array<i64: 48, 14>}, {pipeline_mode = #tpu.pipeline_mode<synchronous>, transform_indices = @transform_2, window_bounds = array<i64: 48, 1>}, {transform_indices = @transform_3, window_bounds = array<i64: 1>}, {pipeline_mode = #tpu.pipeline_mode<synchronous>, transform_indices = @transform_4, window_bounds = array<i64: 32, 47>}, {pipeline_mode = #tpu.pipeline_mode<synchronous>, transform_indices = @transform_5, window_bounds = array<i64: 32, 1>}, {transform_indices = @transform_6, window_bounds = array<i64: 1>}, {pipeline_mode = #tpu.pipeline_mode<synchronous>, transform_indices = @transform_7, window_bounds = array<i64: 3, 31>}, {pipeline_mode = #tpu.pipeline_mode<synchronous>, transform_indices = @transform_8, window_bounds = array<i64: 3, 1>}, {transform_indices = @transform_9, window_bounds = array<i64: 3, 2>}]} {
    %c0 = arith.constant 0 : index
    %c0_0 = arith.constant 0 : index
    %0 = vector.load %arg2[%c0, %c0_0] : memref<48x14xf32, #tpu.memory_space<vmem>>, vector<48x14xf32>
    %c0_1 = arith.constant 0 : index
    %c0_2 = arith.constant 0 : index
    %1 = vector.load %arg1[%c0_1, %c0_2] : memref<14x2xf32, #tpu.memory_space<vmem>>, vector<14x2xf32>
    %cst = arith.constant dense<0.000000e+00> : vector<48x2xf32>
    %2 = tpu.matmul %0, %1, %cst {dimension_numbers = #tpu.dot_dimension_numbers<[1], [0], [0], [1], [0, 0, 1, 1], [], []>} : vector<48x14xf32>, vector<14x2xf32>, vector<48x2xf32> -> vector<48x2xf32>
    %c0_3 = arith.constant 0 : index
    %c0_4 = arith.constant 0 : index
    %3 = vector.load %arg3[%c0_3, %c0_4] : memref<48x1xf32, #tpu.memory_space<vmem>>, vector<48x1xf32>
    %4 = vector.broadcast %3 : vector<48x1xf32> to vector<48x2xf32>
    %5 = arith.addf %2, %4 : vector<48x2xf32>
    %cst_5 = arith.constant 0.000000e+00 : f32
    %6 = vector.broadcast %cst_5 : f32 to vector<48x2xf32>
    %7 = arith.cmpf oge, %5, %6 : vector<48x2xf32>
    %c0_6 = arith.constant 0 : index
    %8 = memref.load %arg4[%c0_6] : memref<1xf32, #tpu.memory_space<smem>>
    %9 = vector.broadcast %8 : f32 to vector<48x2xf32>
    %10 = arith.mulf %9, %5 : vector<48x2xf32>
    %11 = arith.select %7, %5, %10 : vector<48x2xi1>, vector<48x2xf32>
    %12 = vector.extract_strided_slice %11 {offsets = [0, 0], sizes = [47, 2], strides = [1, 1]} : vector<48x2xf32> to vector<47x2xf32>
    %13 = vector.extract_strided_slice %11 {offsets = [1, 0], sizes = [47, 2], strides = [1, 1]} : vector<48x2xf32> to vector<47x2xf32>
    %14 = arith.maximumf %12, %13 : vector<47x2xf32>
    %c0_7 = arith.constant 0 : index
    %c0_8 = arith.constant 0 : index
    %15 = vector.load %arg5[%c0_7, %c0_8] : memref<32x47xf32, #tpu.memory_space<vmem>>, vector<32x47xf32>
    %cst_9 = arith.constant dense<0.000000e+00> : vector<32x2xf32>
    %16 = tpu.matmul %15, %14, %cst_9 {dimension_numbers = #tpu.dot_dimension_numbers<[1], [0], [0], [1], [0, 0, 1, 1], [], []>} : vector<32x47xf32>, vector<47x2xf32>, vector<32x2xf32> -> vector<32x2xf32>
    %c0_10 = arith.constant 0 : index
    %c0_11 = arith.constant 0 : index
    %17 = vector.load %arg6[%c0_10, %c0_11] : memref<32x1xf32, #tpu.memory_space<vmem>>, vector<32x1xf32>
    %18 = vector.broadcast %17 : vector<32x1xf32> to vector<32x2xf32>
    %19 = arith.addf %16, %18 : vector<32x2xf32>
    %cst_12 = arith.constant 0.000000e+00 : f32
    %20 = vector.broadcast %cst_12 : f32 to vector<32x2xf32>
    %21 = arith.cmpf oge, %19, %20 : vector<32x2xf32>
    %c0_13 = arith.constant 0 : index
    %22 = memref.load %arg7[%c0_13] : memref<1xf32, #tpu.memory_space<smem>>
    %23 = vector.broadcast %22 : f32 to vector<32x2xf32>
    %24 = arith.mulf %23, %19 : vector<32x2xf32>
    %25 = arith.select %21, %19, %24 : vector<32x2xi1>, vector<32x2xf32>
    %26 = vector.extract_strided_slice %25 {offsets = [0, 0], sizes = [31, 2], strides = [1, 1]} : vector<32x2xf32> to vector<31x2xf32>
    %27 = vector.extract_strided_slice %25 {offsets = [1, 0], sizes = [31, 2], strides = [1, 1]} : vector<32x2xf32> to vector<31x2xf32>
    %28 = arith.maximumf %26, %27 : vector<31x2xf32>
    %c0_14 = arith.constant 0 : index
    %c0_15 = arith.constant 0 : index
    %29 = vector.load %arg8[%c0_14, %c0_15] : memref<3x31xf32, #tpu.memory_space<vmem>>, vector<3x31xf32>
    %cst_16 = arith.constant dense<0.000000e+00> : vector<3x2xf32>
    %30 = tpu.matmul %29, %28, %cst_16 {dimension_numbers = #tpu.dot_dimension_numbers<[1], [0], [0], [1], [0, 0, 1, 1], [], []>} : vector<3x31xf32>, vector<31x2xf32>, vector<3x2xf32> -> vector<3x2xf32>
    %c0_17 = arith.constant 0 : index
    %c0_18 = arith.constant 0 : index
    %31 = vector.load %arg9[%c0_17, %c0_18] : memref<3x1xf32, #tpu.memory_space<vmem>>, vector<3x1xf32>
    %32 = vector.broadcast %31 : vector<3x1xf32> to vector<3x2xf32>
    %33 = arith.addf %30, %32 : vector<3x2xf32>
    %c0_19 = arith.constant 0 : index
    %c0_20 = arith.constant 0 : index
    %34 = vector.load %arg10[%c0_19, %c0_20] : memref<3x2xf32, #tpu.memory_space<vmem>>, vector<3x2xf32>
    tpu.vector_store %arg10[%c0_19, %c0_20], %33 {strides = array<i32>} : memref<3x2xf32, #tpu.memory_space<vmem>>, vector<3x2xf32>,
    return
  }
  func.func @transform_0(%arg0: i32) -> (i32, i32) {
    %c0_i32 = arith.constant 0 : i32
    %c0_i32_0 = arith.constant 0 : i32
    return %c0_i32, %arg0 : i32, i32
  }
  func.func @transform_1(%arg0: i32) -> (i32, i32) {
    %c0_i32 = arith.constant 0 : i32
    %c0_i32_0 = arith.constant 0 : i32
    %c0_i32_1 = arith.constant 0 : i32
    return %c0_i32, %c0_i32_0 : i32, i32
  }
  func.func @transform_2(%arg0: i32) -> (i32, i32) {
    %c0_i32 = arith.constant 0 : i32
    %c0_i32_0 = arith.constant 0 : i32
    %c0_i32_1 = arith.constant 0 : i32
    return %c0_i32, %c0_i32_0 : i32, i32
  }
  func.func @transform_3(%arg0: i32) -> i32 {
    %c0_i32 = arith.constant 0 : i32
    %c0_i32_0 = arith.constant 0 : i32
    return %c0_i32 : i32
  }
  func.func @transform_4(%arg0: i32) -> (i32, i32) {
    %c0_i32 = arith.constant 0 : i32
    %c0_i32_0 = arith.constant 0 : i32
    %c0_i32_1 = arith.constant 0 : i32
    return %c0_i32, %c0_i32_0 : i32, i32
  }
  func.func @transform_5(%arg0: i32) -> (i32, i32) {
    %c0_i32 = arith.constant 0 : i32
    %c0_i32_0 = arith.constant 0 : i32
    %c0_i32_1 = arith.constant 0 : i32
    return %c0_i32, %c0_i32_0 : i32, i32
  }
  func.func @transform_6(%arg0: i32) -> i32 {
    %c0_i32 = arith.constant 0 : i32
    %c0_i32_0 = arith.constant 0 : i32
    return %c0_i32 : i32
  }
  func.func @transform_7(%arg0: i32) -> (i32, i32) {
    %c0_i32 = arith.constant 0 : i32
    %c0_i32_0 = arith.constant 0 : i32
    %c0_i32_1 = arith.constant 0 : i32
    return %c0_i32, %c0_i32_0 : i32, i32
  }
  func.func @transform_8(%arg0: i32) -> (i32, i32) {
    %c0_i32 = arith.constant 0 : i32
    %c0_i32_0 = arith.constant 0 : i32
    %c0_i32_1 = arith.constant 0 : i32
    return %c0_i32, %c0_i32_0 : i32, i32
  }
  func.func @transform_9(%arg0: i32) -> (i32, i32) {
    %c0_i32 = arith.constant 0 : i32
    %c0_i32_0 = arith.constant 0 : i32
    return %c0_i32, %arg0 : i32, i32
  }
}

</mosaic_0001>

<llo_original>
// kernel: tpu_custom_call.1
$region0: #{tpu_custom_call.1}
  #allocation0 [shape = 'u32[]', space=smem, size = 0x4, offset = 0x4, fixed_abs, tag = 'smem constant byte address 0x4 - core index']
  #allocation1 [shape = 'u32[72,128]{1,0:T(1,128)}', space=vmem, size = 0x9000, scoped, tag = 'internal scratch']
  #allocation2 [shape = 'f32[1]{0:T(128)S(6)}', space=smem, size = 0x200, scoped, tag = 'scoped memory for tpu_custom_call.1']
  #allocation3 [shape = 'f32[1]{0:T(128)S(6)}', space=smem, size = 0x200, scoped, tag = 'scoped memory for tpu_custom_call.1']
  %s0 = inlined_call_operand.vmem [shape: f32[14,2], index: 0, kind: input, shape index: {}]
  %s1 = inlined_call_operand.vmem [shape: f32[48,14], index: 1, kind: input, shape index: {}]
  %s2 = inlined_call_operand.vmem [shape: f32[48,1], index: 2, kind: input, shape index: {}]
  %s3 = inlined_call_operand.<no memory space> [shape: f32[1], index: 3, kind: input, shape index: {}]
  %s4 = inlined_call_operand.vmem [shape: f32[32,47], index: 4, kind: input, shape index: {}]
  %s5 = inlined_call_operand.vmem [shape: f32[32,1], index: 5, kind: input, shape index: {}]
  %s6 = inlined_call_operand.<no memory space> [shape: f32[1], index: 6, kind: input, shape index: {}]
  %s7 = inlined_call_operand.vmem [shape: f32[3,31], index: 7, kind: input, shape index: {}]
  %s8 = inlined_call_operand.vmem [shape: f32[3,1], index: 8, kind: input, shape index: {}]
  %s9 = inlined_call_operand.vmem [shape: f32[3,2], index: 9, kind: output, shape index: {}]
  %s10 = sld [smem:[#allocation0]]
  $region46: #{tpu_custom_call.1} parent=0
    _
  %s12 = ssub.s32 1, %s10
  %s13 = scalar_select 0, %s12, %s10
  %14 = sst [smem:[#allocation2]] %s3
  %15 = sst [smem:[#allocation3]] %s6
  // Predicated region
  $region2: #{tpu_custom_call.1} parent=0 // pred_check
    _
  $region3: #{tpu_custom_call.1} parent=0 // pred_check_branch
    %17 = sbr.rel (0) target = $region5
  $region4: #{tpu_custom_call.1} parent=0 // pred_region
    _
  $region5: #{tpu_custom_call.1} parent=0 // pred_fallthru
    _
  // Predicated region
  $region6: #{tpu_custom_call.1} parent=0 // pred_check
    _
  $region7: #{tpu_custom_call.1} parent=0 // pred_check_branch
    %19 = sbr.rel (0) target = $region9
  $region8: #{tpu_custom_call.1} parent=0 // pred_region
    _
  $region9: #{tpu_custom_call.1} parent=0 // pred_fallthru
    _
  // Predicated region
  $region10: #{tpu_custom_call.1} parent=0 // pred_check
    _
  $region11: #{tpu_custom_call.1} parent=0 // pred_check_branch
    %21 = sbr.rel (0) target = $region13
  $region12: #{tpu_custom_call.1} parent=0 // pred_region
    _
  $region13: #{tpu_custom_call.1} parent=0 // pred_fallthru
    _
  // Predicated region
  $region14: #{tpu_custom_call.1} parent=0 // pred_check
    _
  $region15: #{tpu_custom_call.1} parent=0 // pred_check_branch
    %23 = sbr.rel (0) target = $region17
  $region16: #{tpu_custom_call.1} parent=0 // pred_region
    _
  $region17: #{tpu_custom_call.1} parent=0 // pred_fallthru
    _
  // Predicated region
  $region18: #{tpu_custom_call.1} parent=0 // pred_check
    _
  $region19: #{tpu_custom_call.1} parent=0 // pred_check_branch
    %25 = sbr.rel (0) target = $region21
  $region20: #{tpu_custom_call.1} parent=0 // pred_region
    _
  $region21: #{tpu_custom_call.1} parent=0 // pred_fallthru
    _
  // Predicated region
  $region22: #{tpu_custom_call.1} parent=0 // pred_check
    _
  $region23: #{tpu_custom_call.1} parent=0 // pred_check_branch
    %27 = sbr.rel (0) target = $region25
  $region24: #{tpu_custom_call.1} parent=0 // pred_region
    _
  $region25: #{tpu_custom_call.1} parent=0 // pred_fallthru
    _
  // Predicated region
  $region26: #{tpu_custom_call.1} parent=0 // pred_check
    _
  $region27: #{tpu_custom_call.1} parent=0 // pred_check_branch
    %29 = sbr.rel (0) target = $region29
  $region28: #{tpu_custom_call.1} parent=0 // pred_region
    _
  $region29: #{tpu_custom_call.1} parent=0 // pred_fallthru
    _
  // Predicated region
  $region30: #{tpu_custom_call.1} parent=0 // pred_check
    _
  $region31: #{tpu_custom_call.1} parent=0 // pred_check_branch
    %31 = sbr.rel (0) target = $region33
  $region32: #{tpu_custom_call.1} parent=0 // pred_region
    _
  $region33: #{tpu_custom_call.1} parent=0 // pred_fallthru
    _
  // Predicated region
  $region34: #{tpu_custom_call.1} parent=0 // pred_check
    _
  $region35: #{tpu_custom_call.1} parent=0 // pred_check_branch
    %33 = sbr.rel (0) target = $region37
  $region36: #{tpu_custom_call.1} parent=0 // pred_region
    _
  $region37: #{tpu_custom_call.1} parent=0 // pred_fallthru
    _
  %v34 = vld [vmem:[%s1] sm:$0xff]
  %v35 = vld [vmem:[%s1 + $0x8] sm:$0xff]
  %v36 = vld [vmem:[%s1 + $0x10] sm:$0xff]
  %v37 = vld [vmem:[%s1 + $0x18] sm:$0xff]
  %v38 = vld [vmem:[%s1 + $0x20] sm:$0xff]
  %v39 = vld [vmem:[%s1 + $0x28] sm:$0xff]
  %v40 = vld [vmem:[%s0] sm:$0xff]
  %v41 = vld [vmem:[%s0 + $0x8] sm:$0x3f]
  %v42 = vld [vmem:[%s2] sm:$0xff]
  %v43 = vld [vmem:[%s2 + $0x8] sm:$0xff]
  %v44 = vld [vmem:[%s2 + $0x10] sm:$0xff]
  %v45 = vld [vmem:[%s2 + $0x18] sm:$0xff]
  %v46 = vld [vmem:[%s2 + $0x20] sm:$0xff]
  %v47 = vld [vmem:[%s2 + $0x28] sm:$0xff]
  %49 = vset.pattern.permute.xlu0 0
  %50 = vperm.xlu0 %49, %v42
  %v51 = vpop.permute.xlu0 %50
  %54 = vset.pattern.permute.xlu0 0
  %55 = vperm.xlu0 %54, %v43
  %v56 = vpop.permute.xlu0 %55
  %59 = vset.pattern.permute.xlu0 0
  %60 = vperm.xlu0 %59, %v44
  %v61 = vpop.permute.xlu0 %60
  %64 = vset.pattern.permute.xlu0 0
  %65 = vperm.xlu0 %64, %v45
  %v66 = vpop.permute.xlu0 %65
  %69 = vset.pattern.permute.xlu0 0
  %70 = vperm.xlu0 %69, %v46
  %v71 = vpop.permute.xlu0 %70
  %74 = vset.pattern.permute.xlu0 0
  %75 = vperm.xlu0 %74, %v47
  %v76 = vpop.permute.xlu0 %75
  %vm78 = vcmask 113664
  %v80 = vsel %vm78, %v34, 0
  %v83 = vsel %vm78, %v35, 0
  %v86 = vsel %vm78, %v36, 0
  %v89 = vsel %vm78, %v37, 0
  %v92 = vsel %vm78, %v38, 0
  %v95 = vsel %vm78, %v39, 0
  %vm97 = vcmask 1045504
  %v99 = vsel %vm97, %v41, 0
  %101 = vmatpush.msra.mxu0 0.0
  %102 = vmatpush.msra.mxu0 0.0
  %103 = vmatpush.msra.mxu0 0.0
  %104 = vmatpush.msra.mxu0 0.0
  %105 = vmatpush.msra.mxu0 0.0
  %106 = vmatpush.msra.mxu0 0.0
  %107 = vmatpush.msra.mxu0 0.0
  %108 = vmatpush.msra.mxu0 0.0
  %109 = vmatpush.msra.mxu0 0.0
  %110 = vmatpush.msra.mxu0 0.0
  %111 = vmatpush.msra.mxu0 0.0
  %112 = vmatpush.msra.mxu0 0.0
  %113 = vmatpush.msra.mxu0 0.0
  %114 = vmatpush.msra.mxu0 0.0
  %115 = vmatpush.msra.mxu0 %v99
  %116 = vmatpush.msra.mxu0 %v40
  %117 = vmatmul.f32.gmra.mxu0 %v80
  %v118 = vpop.f32.mrf.mxu0
  %v119 = vadd.f32 %v51, %v118
  %120 = vmatmul.f32.gmra.mxu0 %v83
  %v121 = vpop.f32.mrf.mxu0
  %v122 = vadd.f32 %v56, %v121
  %123 = vmatmul.f32.gmra.mxu0 %v86
  %v124 = vpop.f32.mrf.mxu0
  %v125 = vadd.f32 %v61, %v124
  %126 = vmatmul.f32.gmra.mxu0 %v89
  %v127 = vpop.f32.mrf.mxu0
  %v128 = vadd.f32 %v66, %v127
  %129 = vmatmul.f32.gmra.mxu0 %v92
  %v130 = vpop.f32.mrf.mxu0
  %v131 = vadd.f32 %v71, %v130
  %132 = vmatmul.f32.gmra.mxu0 %v95
  %v133 = vpop.f32.mrf.mxu0
  %v134 = vadd.f32 %v76, %v133
  %135 = vdwg.mxu0
  %vm136 = vcmp.ge.f32.partialorder %v119, 0.0
  %vm137 = vcmp.ge.f32.partialorder %v122, 0.0
  %vm138 = vcmp.ge.f32.partialorder %v125, 0.0
  %vm139 = vcmp.ge.f32.partialorder %v128, 0.0
  %vm140 = vcmp.ge.f32.partialorder %v131, 0.0
  %vm141 = vcmp.ge.f32.partialorder %v134, 0.0
  %s142 = sld [smem:[#allocation2]]
  %v143 = vstv %s142
  %v144 = vmul.f32 %v143, %v119
  %v145 = vmul.f32 %v143, %v122
  %v146 = vmul.f32 %v143, %v125
  %v147 = vmul.f32 %v143, %v128
  %v148 = vmul.f32 %v143, %v131
  %v149 = vmul.f32 %v143, %v134
  %v150 = vsel %vm136, %v119, %v144
  %v151 = vsel %vm137, %v122, %v145
  %v152 = vsel %vm138, %v125, %v146
  %v153 = vsel %vm139, %v128, %v147
  %v154 = vsel %vm140, %v131, %v148
  %v155 = vsel %vm141, %v134, %v149
  %vm162 = vcmask 1046528
  %v163 = vrot.slane %v150, 1
  %v164 = vrot.slane %v151, 1
  %v165 = vsel %vm162, %v163, %v164
  %v166 = vrot.slane %v152, 1
  %v167 = vsel %vm162, %v164, %v166
  %v168 = vrot.slane %v153, 1
  %v169 = vsel %vm162, %v166, %v168
  %v170 = vrot.slane %v154, 1
  %v171 = vsel %vm162, %v168, %v170
  %v172 = vrot.slane %v155, 1
  %v173 = vsel %vm162, %v170, %v172
  %v180 = vmax.f32 %v150, %v165
  %v181 = vmax.f32 %v151, %v167
  %v182 = vmax.f32 %v152, %v169
  %v183 = vmax.f32 %v153, %v171
  %v184 = vmax.f32 %v154, %v173
  %v185 = vmax.f32 %v155, %v172
  %v186 = vld [vmem:[%s4] sm:$0xff]
  %v187 = vld [vmem:[%s4 + $0x8] sm:$0xff]
  %v188 = vld [vmem:[%s4 + $0x10] sm:$0xff]
  %v189 = vld [vmem:[%s4 + $0x18] sm:$0xff]
  %v190 = vld [vmem:[%s5] sm:$0xff]
  %v191 = vld [vmem:[%s5 + $0x8] sm:$0xff]
  %v192 = vld [vmem:[%s5 + $0x10] sm:$0xff]
  %v193 = vld [vmem:[%s5 + $0x18] sm:$0xff]
  %195 = vset.pattern.permute.xlu0 0
  %196 = vperm.xlu0 %195, %v190
  %v197 = vpop.permute.xlu0 %196
  %200 = vset.pattern.permute.xlu0 0
  %201 = vperm.xlu0 %200, %v191
  %v202 = vpop.permute.xlu0 %201
  %205 = vset.pattern.permute.xlu0 0
  %206 = vperm.xlu0 %205, %v192
  %v207 = vpop.permute.xlu0 %206
  %210 = vset.pattern.permute.xlu0 0
  %211 = vperm.xlu0 %210, %v193
  %v212 = vpop.permute.xlu0 %211
  %vm214 = vcmask 384000
  %v216 = vsel %vm214, %v186, 0
  %v219 = vsel %vm214, %v187, 0
  %v222 = vsel %vm214, %v188, 0
  %v225 = vsel %vm214, %v189, 0
  %v228 = vsel %vm162, %v185, 0
  %230 = vmatpush.msra.mxu0 0.0
  %231 = vmatpush.msra.mxu0 0.0
  %232 = vmatpush.msra.mxu0 0.0
  %233 = vmatpush.msra.mxu0 0.0
  %234 = vmatpush.msra.mxu0 0.0
  %235 = vmatpush.msra.mxu0 0.0
  %236 = vmatpush.msra.mxu0 0.0
  %237 = vmatpush.msra.mxu0 0.0
  %238 = vmatpush.msra.mxu0 0.0
  %239 = vmatpush.msra.mxu0 0.0
  %240 = vmatpush.msra.mxu0 %v228
  %241 = vmatpush.msra.mxu0 %v184
  %242 = vmatpush.msra.mxu0 %v183
  %243 = vmatpush.msra.mxu0 %v182
  %244 = vmatpush.msra.mxu0 %v181
  %245 = vmatpush.msra.mxu0 %v180
  %246 = vmatmul.f32.gmra.mxu0 %v216
  %v247 = vpop.f32.mrf.mxu0
  %v248 = vadd.f32 %v197, %v247
  %249 = vmatmul.f32.gmra.mxu0 %v219
  %v250 = vpop.f32.mrf.mxu0
  %v251 = vadd.f32 %v202, %v250
  %252 = vmatmul.f32.gmra.mxu0 %v222
  %v253 = vpop.f32.mrf.mxu0
  %v254 = vadd.f32 %v207, %v253
  %255 = vmatmul.f32.gmra.mxu0 %v225
  %v256 = vpop.f32.mrf.mxu0
  %v257 = vadd.f32 %v212, %v256
  %258 = vdwg.mxu0
  %vm259 = vcmp.ge.f32.partialorder %v248, 0.0
  %vm260 = vcmp.ge.f32.partialorder %v251, 0.0
  %vm261 = vcmp.ge.f32.partialorder %v254, 0.0
  %vm262 = vcmp.ge.f32.partialorder %v257, 0.0
  %s263 = sld [smem:[#allocation3]]
  %v264 = vstv %s263
  %v265 = vmul.f32 %v264, %v248
  %v266 = vmul.f32 %v264, %v251
  %v267 = vmul.f32 %v264, %v254
  %v268 = vmul.f32 %v264, %v257
  %v269 = vsel %vm259, %v248, %v265
  %v270 = vsel %vm260, %v251, %v266
  %v271 = vsel %vm261, %v254, %v267
  %v272 = vsel %vm262, %v257, %v268
  %v277 = vrot.slane %v269, 1
  %v278 = vrot.slane %v270, 1
  %v279 = vsel %vm162, %v277, %v278
  %v280 = vrot.slane %v271, 1
  %v281 = vsel %vm162, %v278, %v280
  %v282 = vrot.slane %v272, 1
  %v283 = vsel %vm162, %v280, %v282
  %v288 = vmax.f32 %v269, %v279
  %v289 = vmax.f32 %v270, %v281
  %v290 = vmax.f32 %v271, %v283
  %v291 = vmax.f32 %v272, %v282
  %v292 = vld [vmem:[%s7] sm:$0x7]
  %v293 = vld [vmem:[%s8] sm:$0x7]
  %295 = vset.pattern.permute.xlu0 0
  %296 = vperm.xlu0 %295, %v293
  %v297 = vpop.permute.xlu0 %296
  %vm299 = vcmask 252928
  %v301 = vsel %vm299, %v292, 0
  %v304 = vsel %vm162, %v291, 0
  %306 = vmatpush.msra.mxu0 0.0
  %307 = vmatpush.msra.mxu0 0.0
  %308 = vmatpush.msra.mxu0 0.0
  %309 = vmatpush.msra.mxu0 0.0
  %310 = vmatpush.msra.mxu0 0.0
  %311 = vmatpush.msra.mxu0 0.0
  %312 = vmatpush.msra.mxu0 0.0
  %313 = vmatpush.msra.mxu0 0.0
  %314 = vmatpush.msra.mxu0 0.0
  %315 = vmatpush.msra.mxu0 0.0
  %316 = vmatpush.msra.mxu0 0.0
  %317 = vmatpush.msra.mxu0 0.0
  %318 = vmatpush.msra.mxu0 %v304
  %319 = vmatpush.msra.mxu0 %v290
  %320 = vmatpush.msra.mxu0 %v289
  %321 = vmatpush.msra.mxu0 %v288
  %322 = vmatmul.f32.gmra.mxu0 %v301
  %v323 = vpop.f32.mrf.mxu0
  %v324 = vadd.f32 %v297, %v323
  %325 = vdwg.mxu0
  %vm326 = vcmask 10240
  %327 = vst.msk [vmem:[%s9] sm:$0x7] %vm326, %v324
  // Predicated region
  $region38: #{tpu_custom_call.1} parent=0 // pred_check
    _
  $region39: #{tpu_custom_call.1} parent=0 // pred_check_branch
    %329 = sbr.rel (0) target = $region41
  $region40: #{tpu_custom_call.1} parent=0 // pred_region
    _
  $region41: #{tpu_custom_call.1} parent=0 // pred_fallthru
    _
  // Predicated region
  $region42: #{tpu_custom_call.1} parent=0 // pred_check
    _
  $region43: #{tpu_custom_call.1} parent=0 // pred_check_branch
    %331 = sbr.rel (0) target = $region45
  $region44: #{tpu_custom_call.1} parent=0 // pred_region
    _
  $region45: #{tpu_custom_call.1} parent=0 // pred_fallthru
    _

</llo_original>
